<compile_context>
chip_gen: v7x
topology: tpu7x:2x2x1
jax: 0.10.0
libtpu: 0.0.40
codegen_flags: <defaults>
</compile_context>

<pallas_src>
import jax
import jax.numpy as jnp
from jax.experimental import pallas as pl
from jax.experimental.pallas import tpu as pltpu


def _decoder_kernel(lab_ref, z_ref, w1l_ref, w1c_ref, b1_ref, w2_ref, b2_ref,
                    out_ref):
    """out = tanh( relu(z @ W1_lat + onehot(lab) @ W1_cls + b1) @ W2 + b2 )

    One batch tile ([TB, .]) per grid step.  All three dots hit the MXU with
    bf16 operands and f32 accumulation; bias / ReLU / tanh run on VPU/EUP in
    f32.  Weights are whole-array blocks (tiny, shared across tiles).  The
    only narrowing cast is at the store, so HBM writeback is bf16.
    """
    tb = z_ref.shape[0]
    nc = w1c_ref.shape[0]

    # In-kernel one-hot of the class id: [TB, 1] int32 vs iota [TB, NC].
    lab = lab_ref[...]                                           # [TB, 1]
    onehot = (lab == jax.lax.broadcasted_iota(jnp.int32, (tb, nc), 1)
              ).astype(w1c_ref.dtype)                            # [TB, NC] bf16

    # Layer 1: latent part (K=Z) + class-embedding part (K=NC).
    h = jnp.dot(z_ref[...].astype(w1l_ref.dtype), w1l_ref[...],
                preferred_element_type=jnp.float32)              # [TB, H] f32
    h = h + jnp.dot(onehot, w1c_ref[...],
                    preferred_element_type=jnp.float32)
    h = jnp.maximum(h + b1_ref[...], 0.0)                        # f32 ReLU

    # Layer 2 + tanh (f32, v5e-safe); narrow only at the store.
    o = jnp.dot(h.astype(w2_ref.dtype), w2_ref[...],
                preferred_element_type=jnp.float32)              # [TB, D] f32
    out_ref[...] = jnp.tanh(o + b2_ref[...]).astype(out_ref.dtype)


def _round_up(x, m):
    return ((x + m - 1) // m) * m


def _choose_batch_tile(b):
    """Big tiles amortize the ~0.35us/step grid overhead; for large batches
    keep the grid length even so the 'parallel' batch axis splits across both
    v7x TensorCores (a no-op on v5e/v6e)."""
    if b <= 512:
        return _round_up(max(b, 8), 8)          # single tile
    n_tiles = max(2, pl.cdiv(b, 1024))          # ~1024-row tiles
    if n_tiles % 2:
        n_tiles += 1                            # even grid => both v7x TCs busy
    return _round_up(pl.cdiv(b, n_tiles), 8)


def decoder_pallas(latent, label, w1_lat, w1_cls, b1, w2, b2, *,
                   batch_tile=None, out_dtype=jnp.bfloat16):
    """latent: [B, Z] f32 or bf16, label: [B] int -> flat image [B, D_out]."""
    B, Z = latent.shape
    NC, H = w1_cls.shape
    D_out = w2.shape[1]

    if batch_tile is None:
        batch_tile = _choose_batch_tile(B)

    # Pad the batch to a multiple of the tile (padded rows sliced off below).
    pad = (-B) % batch_tile
    if pad:
        latent = jnp.concatenate(
            [latent, jnp.zeros((pad, Z), latent.dtype)], axis=0)
        label = jnp.concatenate(
            [label, jnp.zeros((pad,), label.dtype)], axis=0)
    Bp = B + pad
    label2d = label.reshape(Bp, 1).astype(jnp.int32)

    in_itemsize = jnp.dtype(latent.dtype).itemsize
    out_itemsize = jnp.dtype(out_dtype).itemsize
    weight_bytes = (w1_lat.size + w1_cls.size + w2.size) * 2 \
                   + (b1.size + b2.size) * 4
    cost = pl.CostEstimate(
        flops=2 * Bp * (Z + NC) * H + 2 * Bp * H * D_out,
        transcendentals=Bp * D_out,
        bytes_accessed=Bp * (Z * in_itemsize + 4)
                       + Bp * D_out * out_itemsize
                       + weight_bytes,
    )

    out = pl.pallas_call(
        _decoder_kernel,
        out_shape=jax.ShapeDtypeStruct((Bp, D_out), out_dtype),
        grid=(Bp // batch_tile,),
        in_specs=[
            pl.BlockSpec((batch_tile, 1), lambda i: (i, 0)),       # labels
            pl.BlockSpec((batch_tile, Z), lambda i: (i, 0)),       # latent
            pl.BlockSpec(w1_lat.shape, lambda i: (0, 0)),          # W1 latent
            pl.BlockSpec(w1_cls.shape, lambda i: (0, 0)),          # W1 class
            pl.BlockSpec(b1.shape, lambda i: (0, 0)),              # b1
            pl.BlockSpec(w2.shape, lambda i: (0, 0)),              # W2
            pl.BlockSpec(b2.shape, lambda i: (0, 0)),              # b2
        ],
        # Single lane-dense [TB, D_out] block (D_out multiple of 128 =>
        # unmasked vst); do not split D_out.
        out_specs=pl.BlockSpec((batch_tile, D_out), lambda i: (i, 0)),
        compiler_params=pltpu.CompilerParams(
            dimension_semantics=("parallel",)),                    # v7x: 2 TCs
        cost_estimate=cost,
    )(label2d, latent, w1_lat, w1_cls, b1, w2, b2)
    return out[:B]


class CNetGPallas:
    """JAX/Pallas equivalent of CNetG: forward(input, label) -> decoder(input, label)."""

    def __init__(self, latent_dim, num_classes, hidden_dim, out_ch, out_h,
                 out_w, key, out_dtype=jnp.bfloat16):
        self.latent_dim = latent_dim
        self.num_classes = num_classes
        self.out_ch, self.out_h, self.out_w = out_ch, out_h, out_w
        self.out_dtype = out_dtype
        d_out = out_ch * out_h * out_w
        k1, k2, k3 = jax.random.split(key, 3)
        # Deterministic synthetic weights (small scale so tanh is not
        # saturated).  Weights in bf16 for the MXU; biases stay f32 for the
        # elementwise path.
        self.w1_lat = (jax.random.normal(k1, (latent_dim, hidden_dim),
                                         jnp.float32)
                       * (1.0 / jnp.sqrt(latent_dim))).astype(jnp.bfloat16)
        self.w1_cls = (jax.random.normal(k3, (num_classes, hidden_dim),
                                         jnp.float32)
                       * (1.0 / jnp.sqrt(latent_dim))).astype(jnp.bfloat16)
        self.b1 = jnp.zeros((1, hidden_dim), jnp.float32)
        self.w2 = (jax.random.normal(k2, (hidden_dim, d_out), jnp.float32)
                   * (1.0 / jnp.sqrt(hidden_dim))).astype(jnp.bfloat16)
        self.b2 = jnp.zeros((1, d_out), jnp.float32)

    def __call__(self, latent, label):
        flat = decoder_pallas(latent, label, self.w1_lat, self.w1_cls,
                              self.b1, self.w2, self.b2,
                              out_dtype=self.out_dtype)
        B = latent.shape[0]
        # NCHW output, matching the PyTorch decoder convention.
        return flat.reshape(B, self.out_ch, self.out_h, self.out_w)


def _reference_forward(model, latent, label):
    """Pure-JAX reference of the same decoder for a correctness check."""
    onehot = jax.nn.one_hot(label, model.num_classes, dtype=model.w1_cls.dtype)
    h = (jnp.dot(latent.astype(model.w1_lat.dtype), model.w1_lat,
                 preferred_element_type=jnp.float32)
         + jnp.dot(onehot, model.w1_cls, preferred_element_type=jnp.float32))
    h = jnp.maximum(h + model.b1, 0.0)
    o = jnp.dot(h.astype(model.w2.dtype), model.w2,
                preferred_element_type=jnp.float32)
    o = jnp.tanh(o + model.b2)
    return o.reshape(latent.shape[0], model.out_ch, model.out_h, model.out_w)


if __name__ == "__main__":
    key = jax.random.PRNGKey(0)
    k_param, k_latent, k_label = jax.random.split(key, 3)

    # Small demo shapes: B=64 (single 64-row tile), latent=32, 8 classes,
    # hidden=128, image 1x16x16 (flat D_out = 256, lane-dense).
    B, Z, NC, H = 64, 32, 8, 128
    OUT_C, OUT_H, OUT_W = 1, 16, 16

    model = CNetGPallas(latent_dim=Z, num_classes=NC, hidden_dim=H,
                        out_ch=OUT_C, out_h=OUT_H, out_w=OUT_W, key=k_param)

    latent = jax.random.normal(k_latent, (B, Z), jnp.float32)
    label = jax.random.randint(k_label, (B,), 0, NC, jnp.int32)

    out = model(latent, label)
    out = jax.block_until_ready(out)

    ref = _reference_forward(model, latent, label)
    assert out.shape == (B, OUT_C, OUT_H, OUT_W)
    assert out.dtype == jnp.bfloat16
    # bf16 weights + bf16 output vs XLA f32-accum reference: loose tolerance.
    assert jnp.allclose(out.astype(jnp.float32), ref, atol=2.5e-2, rtol=2.5e-2)

    print("KERNEL_OK")
</pallas_src>

<mosaic_0001>
module attributes {stable_mosaic.version = 11 : i64} {
  func.func @_decoder_kernel(%arg0: i32, %arg1: memref<64x1xi32, #tpu.memory_space<vmem>>, %arg2: memref<64x32xf32, #tpu.memory_space<vmem>>, %arg3: memref<32x128xbf16, #tpu.memory_space<vmem>>, %arg4: memref<8x128xbf16, #tpu.memory_space<vmem>>, %arg5: memref<1x128xf32, #tpu.memory_space<vmem>>, %arg6: memref<128x256xbf16, #tpu.memory_space<vmem>>, %arg7: memref<1x256xf32, #tpu.memory_space<vmem>>, %arg8: memref<64x256xbf16, #tpu.memory_space<vmem>>) attributes {dimension_semantics = [#tpu.dimension_semantics<parallel>], iteration_bounds = array<i64: 1>, scalar_prefetch = 0 : i64, scratch_operands = 0 : i64, tpu.core_type = #tpu.core_type<tc>, window_params = [{transform_indices = @transform_0, window_bounds = array<i64: 64, 1>}, {transform_indices = @transform_1, window_bounds = array<i64: 64, 32>}, {pipeline_mode = #tpu.pipeline_mode<synchronous>, transform_indices = @transform_2, window_bounds = array<i64: 32, 128>}, {pipeline_mode = #tpu.pipeline_mode<synchronous>, transform_indices = @transform_3, window_bounds = array<i64: 8, 128>}, {pipeline_mode = #tpu.pipeline_mode<synchronous>, transform_indices = @transform_4, window_bounds = array<i64: 1, 128>}, {pipeline_mode = #tpu.pipeline_mode<synchronous>, transform_indices = @transform_5, window_bounds = array<i64: 128, 256>}, {pipeline_mode = #tpu.pipeline_mode<synchronous>, transform_indices = @transform_6, window_bounds = array<i64: 1, 256>}, {transform_indices = @transform_7, window_bounds = array<i64: 64, 256>}]} {
    %c0 = arith.constant 0 : index
    %c0_0 = arith.constant 0 : index
    %0 = vector.load %arg1[%c0, %c0_0] : memref<64x1xi32, #tpu.memory_space<vmem>>, vector<64x1xi32>
    %1 = tpu.iota {dimensions = array<i32: 1>} : vector<64x8xi32>
    %2 = vector.broadcast %0 : vector<64x1xi32> to vector<64x8xi32>
    %3 = arith.cmpi eq, %2, %1 : vector<64x8xi32>
    %4 = arith.extui %3 : vector<64x8xi1> to vector<64x8xi32>
    %5 = arith.sitofp %4 : vector<64x8xi32> to vector<64x8xf32>
    %6 = arith.truncf %5 : vector<64x8xf32> to vector<64x8xbf16>
    %c0_1 = arith.constant 0 : index
    %c0_2 = arith.constant 0 : index
    %7 = vector.load %arg2[%c0_1, %c0_2] : memref<64x32xf32, #tpu.memory_space<vmem>>, vector<64x32xf32>
    %8 = arith.truncf %7 : vector<64x32xf32> to vector<64x32xbf16>
    %c0_3 = arith.constant 0 : index
    %c0_4 = arith.constant 0 : index
    %9 = vector.load %arg3[%c0_3, %c0_4] : memref<32x128xbf16, #tpu.memory_space<vmem>>, vector<32x128xbf16>
    %cst = arith.constant dense<0.000000e+00> : vector<64x128xf32>
    %10 = tpu.matmul %8, %9, %cst {dimension_numbers = #tpu.dot_dimension_numbers<[1], [0], [0], [1], [0, 0, 1, 1], [], []>} : vector<64x32xbf16>, vector<32x128xbf16>, vector<64x128xf32> -> vector<64x128xf32>
    %c0_5 = arith.constant 0 : index
    %c0_6 = arith.constant 0 : index
    %11 = vector.load %arg4[%c0_5, %c0_6] : memref<8x128xbf16, #tpu.memory_space<vmem>>, vector<8x128xbf16>
    %cst_7 = arith.constant dense<0.000000e+00> : vector<64x128xf32>
    %12 = tpu.matmul %6, %11, %cst_7 {dimension_numbers = #tpu.dot_dimension_numbers<[1], [0], [0], [1], [0, 0, 1, 1], [], []>} : vector<64x8xbf16>, vector<8x128xbf16>, vector<64x128xf32> -> vector<64x128xf32>
    %13 = arith.addf %10, %12 : vector<64x128xf32>
    %c0_8 = arith.constant 0 : index
    %c0_9 = arith.constant 0 : index
    %14 = vector.load %arg5[%c0_8, %c0_9] : memref<1x128xf32, #tpu.memory_space<vmem>>, vector<1x128xf32>
    %15 = vector.broadcast %14 : vector<1x128xf32> to vector<64x128xf32>
    %16 = arith.addf %13, %15 : vector<64x128xf32>
    %cst_10 = arith.constant 0.000000e+00 : f32
    %17 = vector.broadcast %cst_10 : f32 to vector<64x128xf32>
    %18 = arith.maximumf %16, %17 : vector<64x128xf32>
    %19 = arith.truncf %18 : vector<64x128xf32> to vector<64x128xbf16>
    %c0_11 = arith.constant 0 : index
    %c0_12 = arith.constant 0 : index
    %20 = vector.load %arg6[%c0_11, %c0_12] : memref<128x256xbf16, #tpu.memory_space<vmem>>, vector<128x256xbf16>
    %cst_13 = arith.constant dense<0.000000e+00> : vector<64x256xf32>
    %21 = tpu.matmul %19, %20, %cst_13 {dimension_numbers = #tpu.dot_dimension_numbers<[1], [0], [0], [1], [0, 0, 1, 1], [], []>} : vector<64x128xbf16>, vector<128x256xbf16>, vector<64x256xf32> -> vector<64x256xf32>
    %c0_14 = arith.constant 0 : index
    %c0_15 = arith.constant 0 : index
    %22 = vector.load %arg7[%c0_14, %c0_15] : memref<1x256xf32, #tpu.memory_space<vmem>>, vector<1x256xf32>
    %23 = vector.broadcast %22 : vector<1x256xf32> to vector<64x256xf32>
    %24 = arith.addf %21, %23 : vector<64x256xf32>
    %25 = math.tanh %24 : vector<64x256xf32>
    %26 = arith.truncf %25 : vector<64x256xf32> to vector<64x256xbf16>
    %c0_16 = arith.constant 0 : index
    %c0_17 = arith.constant 0 : index
    %27 = vector.load %arg8[%c0_16, %c0_17] : memref<64x256xbf16, #tpu.memory_space<vmem>>, vector<64x256xbf16>
    tpu.vector_store %arg8[%c0_16, %c0_17], %26 {strides = array<i32>} : memref<64x256xbf16, #tpu.memory_space<vmem>>, vector<64x256xbf16>,
    return
  }
  func.func @transform_0(%arg0: i32) -> (i32, i32) {
    %c0_i32 = arith.constant 0 : i32
    %c0_i32_0 = arith.constant 0 : i32
    return %arg0, %c0_i32 : i32, i32
  }
  func.func @transform_1(%arg0: i32) -> (i32, i32) {
    %c0_i32 = arith.constant 0 : i32
    %c0_i32_0 = arith.constant 0 : i32
    return %arg0, %c0_i32 : i32, i32
  }
  func.func @transform_2(%arg0: i32) -> (i32, i32) {
    %c0_i32 = arith.constant 0 : i32
    %c0_i32_0 = arith.constant 0 : i32
    %c0_i32_1 = arith.constant 0 : i32
    return %c0_i32, %c0_i32_0 : i32, i32
  }
  func.func @transform_3(%arg0: i32) -> (i32, i32) {
    %c0_i32 = arith.constant 0 : i32
    %c0_i32_0 = arith.constant 0 : i32
    %c0_i32_1 = arith.constant 0 : i32
    return %c0_i32, %c0_i32_0 : i32, i32
  }
  func.func @transform_4(%arg0: i32) -> (i32, i32) {
    %c0_i32 = arith.constant 0 : i32
    %c0_i32_0 = arith.constant 0 : i32
    %c0_i32_1 = arith.constant 0 : i32
    return %c0_i32, %c0_i32_0 : i32, i32
  }
  func.func @transform_5(%arg0: i32) -> (i32, i32) {
    %c0_i32 = arith.constant 0 : i32
    %c0_i32_0 = arith.constant 0 : i32
    %c0_i32_1 = arith.constant 0 : i32
    return %c0_i32, %c0_i32_0 : i32, i32
  }
  func.func @transform_6(%arg0: i32) -> (i32, i32) {
    %c0_i32 = arith.constant 0 : i32
    %c0_i32_0 = arith.constant 0 : i32
    %c0_i32_1 = arith.constant 0 : i32
    return %c0_i32, %c0_i32_0 : i32, i32
  }
  func.func @transform_7(%arg0: i32) -> (i32, i32) {
    %c0_i32 = arith.constant 0 : i32
    %c0_i32_0 = arith.constant 0 : i32
    return %arg0, %c0_i32 : i32, i32
  }
}

</mosaic_0001>

<llo_original>
// kernel: tpu_custom_call.1
$region0: #{tpu_custom_call.1}
  #allocation0 [shape = 'u32[]', space=smem, size = 0x4, offset = 0x4, fixed_abs, tag = 'smem constant byte address 0x4 - core index']
  #allocation1 [shape = 'u32[144,128]{1,0:T(1,128)}', space=vmem, size = 0x12000, scoped, tag = 'internal scratch']
  %s0 = inlined_call_operand.vmem [shape: s32[64,1], index: 0, kind: input, shape index: {}]
  %s1 = inlined_call_operand.vmem [shape: f32[64,32], index: 1, kind: input, shape index: {}]
  %s2 = inlined_call_operand.vmem [shape: bf16[32,128], index: 2, kind: input, shape index: {}]
  %s3 = inlined_call_operand.vmem [shape: bf16[8,128], index: 3, kind: input, shape index: {}]
  %s4 = inlined_call_operand.vmem [shape: f32[1,128], index: 4, kind: input, shape index: {}]
  %s5 = inlined_call_operand.vmem [shape: bf16[128,256], index: 5, kind: input, shape index: {}]
  %s6 = inlined_call_operand.vmem [shape: f32[1,256], index: 6, kind: input, shape index: {}]
  %s7 = inlined_call_operand.hbm [shape: bf16[64,256], index: 7, kind: output, shape index: {}]
  %s8 = sld [smem:[#allocation0]]
  $region38: #{tpu_custom_call.1} parent=0
    _
  %s10 = ssub.s32 1, %s8
  %s11 = scalar_select 0, %s10, %s8
  $region1: #{tpu_custom_call.1} parent=0
    #allocation2 [shape = 'u8[32768]{0}', space=vmem, size = 0x8000, scoped, tag = 'output window, operand 0, single buffered']
    #allocation3 [shape = 's32[1]{0}', space=sflag, size = 0x4, scoped, tag = 'scoped memory for tpu_custom_call.1']
    %12 = vsyncpa [#allocation3], 0
    // Predicated region
    $region2: #{tpu_custom_call.1} parent=1 // pred_check
      _
    $region3: #{tpu_custom_call.1} parent=1 // pred_check_branch
      %14 = sbr.rel (0) target = $region5
    $region4: #{tpu_custom_call.1} parent=1 // pred_region
      _
    $region5: #{tpu_custom_call.1} parent=1 // pred_fallthru
      _
    // Predicated region
    $region6: #{tpu_custom_call.1} parent=1 // pred_check
      _
    $region7: #{tpu_custom_call.1} parent=1 // pred_check_branch
      %16 = sbr.rel (0) target = $region9
    $region8: #{tpu_custom_call.1} parent=1 // pred_region
      _
    $region9: #{tpu_custom_call.1} parent=1 // pred_fallthru
      _
    // Predicated region
    $region10: #{tpu_custom_call.1} parent=1 // pred_check
      _
    $region11: #{tpu_custom_call.1} parent=1 // pred_check_branch
      %18 = sbr.rel (0) target = $region13
    $region12: #{tpu_custom_call.1} parent=1 // pred_region
      _
    $region13: #{tpu_custom_call.1} parent=1 // pred_fallthru
      _
    // Predicated region
    $region14: #{tpu_custom_call.1} parent=1 // pred_check
      _
    $region15: #{tpu_custom_call.1} parent=1 // pred_check_branch
      %20 = sbr.rel (0) target = $region17
    $region16: #{tpu_custom_call.1} parent=1 // pred_region
      _
    $region17: #{tpu_custom_call.1} parent=1 // pred_fallthru
      _
    // Predicated region
    $region18: #{tpu_custom_call.1} parent=1 // pred_check
      _
    $region19: #{tpu_custom_call.1} parent=1 // pred_check_branch
      %22 = sbr.rel (0) target = $region21
    $region20: #{tpu_custom_call.1} parent=1 // pred_region
      _
    $region21: #{tpu_custom_call.1} parent=1 // pred_fallthru
      _
    // Predicated region
    $region22: #{tpu_custom_call.1} parent=1 // pred_check
      _
    $region23: #{tpu_custom_call.1} parent=1 // pred_check_branch
      %24 = sbr.rel (0) target = $region25
    $region24: #{tpu_custom_call.1} parent=1 // pred_region
      _
    $region25: #{tpu_custom_call.1} parent=1 // pred_fallthru
      _
    // Predicated region
    $region26: #{tpu_custom_call.1} parent=1 // pred_check
      _
    $region27: #{tpu_custom_call.1} parent=1 // pred_check_branch
      %26 = sbr.rel (0) target = $region29
    $region28: #{tpu_custom_call.1} parent=1 // pred_region
      _
    $region29: #{tpu_custom_call.1} parent=1 // pred_fallthru
      _
    %v28 = vld [vmem:[%s0] sm:$0xff]
    %v29 = vld [vmem:[%s0 + $0x8] sm:$0xff]
    %v30 = vld [vmem:[%s0 + $0x10] sm:$0xff]
    %v31 = vld [vmem:[%s0 + $0x18] sm:$0xff]
    %v32 = vld [vmem:[%s0 + $0x20] sm:$0xff]
    %v33 = vld [vmem:[%s0 + $0x28] sm:$0xff]
    %v34 = vld [vmem:[%s0 + $0x30] sm:$0xff]
    %v35 = vld [vmem:[%s0 + $0x38] sm:$0xff]
    %v36 = vlaneseq
    %v37 = vand.u32 %v36, 127
    %38 = vset.pattern.permute.xlu0 0
    %39 = vperm.xlu0 %38, %v28
    %v40 = vpop.permute.xlu0 %39
    %41 = vset.pattern.permute.xlu0 0
    %42 = vperm.xlu0 %41, %v29
    %v43 = vpop.permute.xlu0 %42
    %44 = vset.pattern.permute.xlu0 0
    %45 = vperm.xlu0 %44, %v30
    %v46 = vpop.permute.xlu0 %45
    %47 = vset.pattern.permute.xlu0 0
    %48 = vperm.xlu0 %47, %v31
    %v49 = vpop.permute.xlu0 %48
    %50 = vset.pattern.permute.xlu0 0
    %51 = vperm.xlu0 %50, %v32
    %v52 = vpop.permute.xlu0 %51
    %53 = vset.pattern.permute.xlu0 0
    %54 = vperm.xlu0 %53, %v33
    %v55 = vpop.permute.xlu0 %54
    %56 = vset.pattern.permute.xlu0 0
    %57 = vperm.xlu0 %56, %v34
    %v58 = vpop.permute.xlu0 %57
    %59 = vset.pattern.permute.xlu0 0
    %60 = vperm.xlu0 %59, %v35
    %v61 = vpop.permute.xlu0 %60
    %vm62 = vcmp.eq.s32.totalorder %v40, %v37
    %vm63 = vcmp.eq.s32.totalorder %v43, %v37
    %vm64 = vcmp.eq.s32.totalorder %v46, %v37
    %vm65 = vcmp.eq.s32.totalorder %v49, %v37
    %vm66 = vcmp.eq.s32.totalorder %v52, %v37
    %vm67 = vcmp.eq.s32.totalorder %v55, %v37
    %vm68 = vcmp.eq.s32.totalorder %v58, %v37
    %vm69 = vcmp.eq.s32.totalorder %v61, %v37
    %v70 = vsel %vm62, 1, 0
    %v71 = vsel %vm63, 1, 0
    %v72 = vsel %vm64, 1, 0
    %v73 = vsel %vm65, 1, 0
    %v74 = vsel %vm66, 1, 0
    %v75 = vsel %vm67, 1, 0
    %v76 = vsel %vm68, 1, 0
    %v77 = vsel %vm69, 1, 0
    %v78 = vcvt.s32.f32 %v70
    %v79 = vcvt.s32.f32 %v71
    %v80 = vcvt.s32.f32 %v72
    %v81 = vcvt.s32.f32 %v73
    %v82 = vcvt.s32.f32 %v74
    %v83 = vcvt.s32.f32 %v75
    %v84 = vcvt.s32.f32 %v76
    %v85 = vcvt.s32.f32 %v77
    %v86 = vpack.c.bf16 %v79, %v78
    %v87 = vpack.c.bf16 %v81, %v80
    %v88 = vpack.c.bf16 %v83, %v82
    %v89 = vpack.c.bf16 %v85, %v84
    %v90 = vld [vmem:[%s1] sm:$0xff]
    %v91 = vld [vmem:[%s1 + $0x8] sm:$0xff]
    %v92 = vld [vmem:[%s1 + $0x10] sm:$0xff]
    %v93 = vld [vmem:[%s1 + $0x18] sm:$0xff]
    %v94 = vld [vmem:[%s1 + $0x20] sm:$0xff]
    %v95 = vld [vmem:[%s1 + $0x28] sm:$0xff]
    %v96 = vld [vmem:[%s1 + $0x30] sm:$0xff]
    %v97 = vld [vmem:[%s1 + $0x38] sm:$0xff]
    %v98 = vpack.c.bf16 %v91, %v90
    %v99 = vpack.c.bf16 %v93, %v92
    %v100 = vpack.c.bf16 %v95, %v94
    %v101 = vpack.c.bf16 %v97, %v96
    %v102 = vld [vmem:[%s2] sm:$0xf]
    %v103 = vld [vmem:[%s2 + $0x4] sm:$0xf]
    %v104 = vld [vmem:[%s2 + $0x8] sm:$0xf]
    %v105 = vld [vmem:[%s2 + $0xc] sm:$0xf]
    %v106 = vld [vmem:[%s3] sm:$0xf]
    %vm107 = vcmask 64512
    %v109 = vsel %vm107, %v86, 0
    %v112 = vsel %vm107, %v87, 0
    %v115 = vsel %vm107, %v88, 0
    %v118 = vsel %vm107, %v89, 0
    %vm120 = vcmask 1043456
    %v122 = vsel %vm120, %v106, 0
    %124 = vmatprep.subr.bf16.mxu0 0
    %125 = vmatpush1.bf16.msra.mxu0 %v122
    %126 = vmatprep.subr.bf16.mxu0 0
    %127 = vmatpush1.bf16.msra.mxu0 0
    %128 = vmatprep.subr.bf16.mxu0 0
    %129 = vmatpush1.bf16.msra.mxu0 0
    %130 = vmatprep.subr.bf16.mxu0 0
    %131 = vmatpush1.bf16.msra.mxu0 0
    %132 = vmatprep.subr.bf16.mxu0 0
    %133 = vmatpush1.bf16.msra.mxu0 0
    %134 = vmatprep.subr.bf16.mxu0 0
    %135 = vmatpush1.bf16.msra.mxu0 0
    %136 = vmatprep.subr.bf16.mxu0 0
    %137 = vmatpush1.bf16.msra.mxu0 0
    %138 = vmatprep.subr.bf16.mxu0 0
    %139 = vmatpush1.bf16.msra.mxu0 0
    %140 = vmatprep.subr.bf16.mxu0 0
    %141 = vmatpush1.bf16.msra.mxu0 0
    %142 = vmatprep.subr.bf16.mxu0 0
    %143 = vmatpush1.bf16.msra.mxu0 0
    %144 = vmatprep.subr.bf16.mxu0 0
    %145 = vmatpush1.bf16.msra.mxu0 0
    %146 = vmatprep.subr.bf16.mxu0 0
    %147 = vmatpush1.bf16.msra.mxu0 0
    %148 = vmatprep.subr.bf16.mxu0 0
    %149 = vmatpush1.bf16.msra.mxu0 0
    %150 = vmatprep.subr.bf16.mxu0 0
    %151 = vmatpush1.bf16.msra.mxu0 0
    %152 = vmatprep.subr.bf16.mxu0 0
    %153 = vmatpush1.bf16.msra.mxu0 0
    %154 = vmatprep.subr.bf16.mxu0 0
    %155 = vmatpush1.bf16.msra.mxu0 0
    %156 = vmatprep.mubr.bf16.mxu0 0
    %157 = vmatmul.mubr.bf16.gmra.mrb[0].mxu0 %v109
    %v158 = vpop.f32.mrb[0].mxu0
    %v159 = vadd.f32 0.0, %v158
    %v160 = vpop.f32.mrb[0].mxu0
    %v161 = vpop.f32.mrb[0].mxu0
    %v162 = vadd.f32 0.0, %v161
    %v163 = vpop.f32.mrb[0].mxu0
    %164 = vmatprep.mubr.bf16.mxu0 0
    %165 = vmatmul.mubr.bf16.gmra.mrb[0].mxu0 %v112
    %v166 = vpop.f32.mrb[0].mxu0
    %v167 = vadd.f32 0.0, %v166
    %v168 = vpop.f32.mrb[0].mxu0
    %v169 = vpop.f32.mrb[0].mxu0
    %v170 = vadd.f32 0.0, %v169
    %v171 = vpop.f32.mrb[0].mxu0
    %172 = vmatprep.mubr.bf16.mxu0 0
    %173 = vmatmul.mubr.bf16.gmra.mrb[0].mxu0 %v115
    %v174 = vpop.f32.mrb[0].mxu0
    %v175 = vadd.f32 0.0, %v174
    %v176 = vpop.f32.mrb[0].mxu0
    %v177 = vpop.f32.mrb[0].mxu0
    %v178 = vadd.f32 0.0, %v177
    %v179 = vpop.f32.mrb[0].mxu0
    %180 = vmatprep.mubr.bf16.mxu0 0
    %181 = vmatmul.mubr.bf16.gmra.mrb[0].mxu0 %v118
    %v182 = vpop.f32.mrb[0].mxu0
    %v183 = vadd.f32 0.0, %v182
    %v184 = vpop.f32.mrb[0].mxu0
    %v185 = vpop.f32.mrb[0].mxu0
    %v186 = vadd.f32 0.0, %v185
    %v187 = vpop.f32.mrb[0].mxu0
    %188 = vdwg.mxu0
    %v193 = vunpack.c.l.b16 %v102
    %v194 = vunpack.c.l.b16 %v103
    %v195 = vunpack.c.l.b16 %v104
    %v196 = vunpack.c.l.b16 %v105
    %v197 = vpack.c.b16 %v194, %v193
    %v198 = vpack.c.b16 %v196, %v195
    %vm201 = vcmask 261120
    %v203 = vsel %vm201, %v98, 0
    %v206 = vsel %vm201, %v99, 0
    %v209 = vsel %vm201, %v100, 0
    %v212 = vsel %vm201, %v101, 0
    %214 = vmatprep.subr.bf16.mxu0 0
    %215 = vmatpush1.bf16.msra.mxu0 %v197
    %216 = vmatprep.subr.bf16.mxu0 0
    %217 = vmatpush1.bf16.msra.mxu0 %v198
    %218 = vmatprep.subr.bf16.mxu0 0
    %219 = vmatpush1.bf16.msra.mxu0 0
    %220 = vmatprep.subr.bf16.mxu0 0
    %221 = vmatpush1.bf16.msra.mxu0 0
    %222 = vmatprep.subr.bf16.mxu0 0
    %223 = vmatpush1.bf16.msra.mxu0 0
    %224 = vmatprep.subr.bf16.mxu0 0
    %225 = vmatpush1.bf16.msra.mxu0 0
    %226 = vmatprep.subr.bf16.mxu0 0
    %227 = vmatpush1.bf16.msra.mxu0 0
    %228 = vmatprep.subr.bf16.mxu0 0
    %229 = vmatpush1.bf16.msra.mxu0 0
    %230 = vmatprep.subr.bf16.mxu0 0
    %231 = vmatpush1.bf16.msra.mxu0 0
    %232 = vmatprep.subr.bf16.mxu0 0
    %233 = vmatpush1.bf16.msra.mxu0 0
    %234 = vmatprep.subr.bf16.mxu0 0
    %235 = vmatpush1.bf16.msra.mxu0 0
    %236 = vmatprep.subr.bf16.mxu0 0
    %237 = vmatpush1.bf16.msra.mxu0 0
    %238 = vmatprep.subr.bf16.mxu0 0
    %239 = vmatpush1.bf16.msra.mxu0 0
    %240 = vmatprep.subr.bf16.mxu0 0
    %241 = vmatpush1.bf16.msra.mxu0 0
    %242 = vmatprep.subr.bf16.mxu0 0
    %243 = vmatpush1.bf16.msra.mxu0 0
    %244 = vmatprep.subr.bf16.mxu0 0
    %245 = vmatpush1.bf16.msra.mxu0 0
    %246 = vmatprep.mubr.bf16.mxu0 0
    %247 = vmatmul.mubr.bf16.gmra.mrb[0].mxu0 %v203
    %v248 = vpop.f32.mrb[0].mxu0
    %v249 = vadd.f32 %v159, %v248
    %v250 = vpop.f32.mrb[0].mxu0
    %v251 = vpop.f32.mrb[0].mxu0
    %v252 = vadd.f32 %v162, %v251
    %v253 = vpop.f32.mrb[0].mxu0
    %254 = vmatprep.mubr.bf16.mxu0 0
    %255 = vmatmul.mubr.bf16.gmra.mrb[0].mxu0 %v206
    %v256 = vpop.f32.mrb[0].mxu0
    %v257 = vadd.f32 %v167, %v256
    %v258 = vpop.f32.mrb[0].mxu0
    %v259 = vpop.f32.mrb[0].mxu0
    %v260 = vadd.f32 %v170, %v259
    %v261 = vpop.f32.mrb[0].mxu0
    %262 = vmatprep.mubr.bf16.mxu0 0
    %263 = vmatmul.mubr.bf16.gmra.mrb[0].mxu0 %v209
    %v264 = vpop.f32.mrb[0].mxu0
    %v265 = vadd.f32 %v175, %v264
    %v266 = vpop.f32.mrb[0].mxu0
    %v267 = vpop.f32.mrb[0].mxu0
    %v268 = vadd.f32 %v178, %v267
    %v269 = vpop.f32.mrb[0].mxu0
    %270 = vmatprep.mubr.bf16.mxu0 0
    %271 = vmatmul.mubr.bf16.gmra.mrb[0].mxu0 %v212
    %v272 = vpop.f32.mrb[0].mxu0
    %v273 = vadd.f32 %v183, %v272
    %v274 = vpop.f32.mrb[0].mxu0
    %v275 = vpop.f32.mrb[0].mxu0
    %v276 = vadd.f32 %v186, %v275
    %v277 = vpop.f32.mrb[0].mxu0
    %278 = vdwg.mxu0
    %v279 = vld [vmem:[%s4] sm:$0x1]
    %v281 = vlaneseq
    %v282 = vshrl.u32 %v281, 7
    %v283 = vsub.s32 0, %v282
    %v284 = vrot.slane %v279, %v283
    %v286 = vadd.f32 %v249, %v284
    %v287 = vadd.f32 %v252, %v284
    %v288 = vadd.f32 %v257, %v284
    %v289 = vadd.f32 %v260, %v284
    %v290 = vadd.f32 %v265, %v284
    %v291 = vadd.f32 %v268, %v284
    %v292 = vadd.f32 %v273, %v284
    %v293 = vadd.f32 %v276, %v284
    %v294 = vmax.f32 %v286, 0.0
    %v295 = vmax.f32 %v287, 0.0
    %v296 = vmax.f32 %v288, 0.0
    %v297 = vmax.f32 %v289, 0.0
    %v298 = vmax.f32 %v290, 0.0
    %v299 = vmax.f32 %v291, 0.0
    %v300 = vmax.f32 %v292, 0.0
    %v301 = vmax.f32 %v293, 0.0
    %v302 = vpack.c.bf16 %v295, %v294
    %v303 = vpack.c.bf16 %v297, %v296
    %v304 = vpack.c.bf16 %v299, %v298
    %v305 = vpack.c.bf16 %v301, %v300
    %v306 = vld [vmem:[%s5] sm:$0xff]
    %v307 = vld [vmem:[%s5 + $0x8] sm:$0xff]
    %v308 = vld [vmem:[%s5 + $0x10] sm:$0xff]
    %v309 = vld [vmem:[%s5 + $0x18] sm:$0xff]
    %v310 = vld [vmem:[%s5 + $0x20] sm:$0xff]
    %v311 = vld [vmem:[%s5 + $0x28] sm:$0xff]
    %v312 = vld [vmem:[%s5 + $0x30] sm:$0xff]
    %v313 = vld [vmem:[%s5 + $0x38] sm:$0xff]
    %v314 = vld [vmem:[%s5 + $0x40] sm:$0xff]
    %v315 = vld [vmem:[%s5 + $0x48] sm:$0xff]
    %v316 = vld [vmem:[%s5 + $0x50] sm:$0xff]
    %v317 = vld [vmem:[%s5 + $0x58] sm:$0xff]
    %v318 = vld [vmem:[%s5 + $0x60] sm:$0xff]
    %v319 = vld [vmem:[%s5 + $0x68] sm:$0xff]
    %v320 = vld [vmem:[%s5 + $0x70] sm:$0xff]
    %v321 = vld [vmem:[%s5 + $0x78] sm:$0xff]
    %v322 = vld [vmem:[%s6] sm:$0x3]
    %v324 = vlaneseq
    %v325 = vshrl.u32 %v324, 7
    %v326 = vsub.s32 0, %v325
    %v327 = vrot.slane %v322, %v326
    %v328 = vlaneseq
    %v329 = vshrl.u32 %v328, 7
    %v330 = vsub.s32 1, %v329
    %v331 = vrot.slane %v322, %v330
    %v350 = vunpack.c.l.b16 %v306
    %v351 = vunpack.c.h.b16 %v306
    %v352 = vunpack.c.l.b16 %v307
    %v353 = vunpack.c.h.b16 %v307
    %v354 = vunpack.c.l.b16 %v308
    %v355 = vunpack.c.h.b16 %v308
    %v356 = vunpack.c.l.b16 %v309
    %v357 = vunpack.c.h.b16 %v309
    %v358 = vunpack.c.l.b16 %v310
    %v359 = vunpack.c.h.b16 %v310
    %v360 = vunpack.c.l.b16 %v311
    %v361 = vunpack.c.h.b16 %v311
    %v362 = vunpack.c.l.b16 %v312
    %v363 = vunpack.c.h.b16 %v312
    %v364 = vunpack.c.l.b16 %v313
    %v365 = vunpack.c.h.b16 %v313
    %v366 = vunpack.c.l.b16 %v314
    %v367 = vunpack.c.h.b16 %v314
    %v368 = vunpack.c.l.b16 %v315
    %v369 = vunpack.c.h.b16 %v315
    %v370 = vunpack.c.l.b16 %v316
    %v371 = vunpack.c.h.b16 %v316
    %v372 = vunpack.c.l.b16 %v317
    %v373 = vunpack.c.h.b16 %v317
    %v374 = vunpack.c.l.b16 %v318
    %v375 = vunpack.c.h.b16 %v318
    %v376 = vunpack.c.l.b16 %v319
    %v377 = vunpack.c.h.b16 %v319
    %v378 = vunpack.c.l.b16 %v320
    %v379 = vunpack.c.h.b16 %v320
    %v380 = vunpack.c.l.b16 %v321
    %v381 = vunpack.c.h.b16 %v321
    %v382 = vpack.c.b16 %v352, %v350
    %v383 = vpack.c.b16 %v353, %v351
    %v384 = vpack.c.b16 %v356, %v354
    %v385 = vpack.c.b16 %v357, %v355
    %v386 = vpack.c.b16 %v360, %v358
    %v387 = vpack.c.b16 %v361, %v359
    %v388 = vpack.c.b16 %v364, %v362
    %v389 = vpack.c.b16 %v365, %v363
    %v390 = vpack.c.b16 %v368, %v366
    %v391 = vpack.c.b16 %v369, %v367
    %v392 = vpack.c.b16 %v372, %v370
    %v393 = vpack.c.b16 %v373, %v371
    %v394 = vpack.c.b16 %v376, %v374
    %v395 = vpack.c.b16 %v377, %v375
    %v396 = vpack.c.b16 %v380, %v378
    %v397 = vpack.c.b16 %v381, %v379
    %414 = vmatprep.subr.bf16.mxu0 %v383
    %415 = vmatpush1.bf16.msra.mxu0 %v382
    %416 = vmatprep.subr.bf16.mxu0 %v385
    %417 = vmatpush1.bf16.msra.mxu0 %v384
    %418 = vmatprep.subr.bf16.mxu0 %v387
    %419 = vmatpush1.bf16.msra.mxu0 %v386
    %420 = vmatprep.subr.bf16.mxu0 %v389
    %421 = vmatpush1.bf16.msra.mxu0 %v388
    %422 = vmatprep.subr.bf16.mxu0 %v391
    %423 = vmatpush1.bf16.msra.mxu0 %v390
    %424 = vmatprep.subr.bf16.mxu0 %v393
    %425 = vmatpush1.bf16.msra.mxu0 %v392
    %426 = vmatprep.subr.bf16.mxu0 %v395
    %427 = vmatpush1.bf16.msra.mxu0 %v394
    %428 = vmatprep.subr.bf16.mxu0 %v397
    %429 = vmatpush1.bf16.msra.mxu0 %v396
    %430 = vmatprep.subr.bf16.mxu0 0
    %431 = vmatpush1.bf16.msra.mxu0 0
    %432 = vmatprep.subr.bf16.mxu0 0
    %433 = vmatpush1.bf16.msra.mxu0 0
    %434 = vmatprep.subr.bf16.mxu0 0
    %435 = vmatpush1.bf16.msra.mxu0 0
    %436 = vmatprep.subr.bf16.mxu0 0
    %437 = vmatpush1.bf16.msra.mxu0 0
    %438 = vmatprep.subr.bf16.mxu0 0
    %439 = vmatpush1.bf16.msra.mxu0 0
    %440 = vmatprep.subr.bf16.mxu0 0
    %441 = vmatpush1.bf16.msra.mxu0 0
    %442 = vmatprep.subr.bf16.mxu0 0
    %443 = vmatpush1.bf16.msra.mxu0 0
    %444 = vmatprep.subr.bf16.mxu0 0
    %445 = vmatpush1.bf16.msra.mxu0 0
    %446 = vmatprep.mubr.bf16.mxu0 0
    %447 = vmatmul.mubr.bf16.gmra.mrb[0].mxu0 %v302
    %v448 = vpop.f32.mrb[0].mxu0
    %v449 = vadd.f32 %v327, %v448
    %v450 = vpop.f32.mrb[0].mxu0
    %v451 = vadd.f32 %v331, %v450
    %v452 = vpop.f32.mrb[0].mxu0
    %v453 = vadd.f32 %v327, %v452
    %v454 = vpop.f32.mrb[0].mxu0
    %v455 = vadd.f32 %v331, %v454
    %456 = vmatprep.mubr.bf16.mxu0 0
    %457 = vmatmul.mubr.bf16.gmra.mrb[0].mxu0 %v303
    %v458 = vpop.f32.mrb[0].mxu0
    %v459 = vadd.f32 %v327, %v458
    %v460 = vpop.f32.mrb[0].mxu0
    %v461 = vadd.f32 %v331, %v460
    %v462 = vpop.f32.mrb[0].mxu0
    %v463 = vadd.f32 %v327, %v462
    %v464 = vpop.f32.mrb[0].mxu0
    %v465 = vadd.f32 %v331, %v464
    %466 = vmatprep.mubr.bf16.mxu0 0
    %467 = vmatmul.mubr.bf16.gmra.mrb[0].mxu0 %v304
    %v468 = vpop.f32.mrb[0].mxu0
    %v469 = vadd.f32 %v327, %v468
    %v470 = vpop.f32.mrb[0].mxu0
    %v471 = vadd.f32 %v331, %v470
    %v472 = vpop.f32.mrb[0].mxu0
    %v473 = vadd.f32 %v327, %v472
    %v474 = vpop.f32.mrb[0].mxu0
    %v475 = vadd.f32 %v331, %v474
    %476 = vmatprep.mubr.bf16.mxu0 0
    %477 = vmatmul.mubr.bf16.gmra.mrb[0].mxu0 %v305
    %v478 = vpop.f32.mrb[0].mxu0
    %v479 = vadd.f32 %v327, %v478
    %v480 = vpop.f32.mrb[0].mxu0
    %v481 = vadd.f32 %v331, %v480
    %v482 = vpop.f32.mrb[0].mxu0
    %v483 = vadd.f32 %v327, %v482
    %v484 = vpop.f32.mrb[0].mxu0
    %v485 = vadd.f32 %v331, %v484
    %486 = vdwg.mxu0
    %v487 = vtanh.pop %v449
    %v488 = vtanh.pop %v451
    %v489 = vtanh.pop %v453
    %v490 = vtanh.pop %v455
    %v491 = vtanh.pop %v459
    %v492 = vtanh.pop %v461
    %v493 = vtanh.pop %v463
    %v494 = vtanh.pop %v465
    %v495 = vtanh.pop %v469
    %v496 = vtanh.pop %v471
    %v497 = vtanh.pop %v473
    %v498 = vtanh.pop %v475
    %v499 = vtanh.pop %v479
    %v500 = vtanh.pop %v481
    %v501 = vtanh.pop %v483
    %v502 = vtanh.pop %v485
    %v503 = vpack.c.bf16 %v489, %v487
    %v504 = vpack.c.bf16 %v490, %v488
    %v505 = vpack.c.bf16 %v493, %v491
    %v506 = vpack.c.bf16 %v494, %v492
    %v507 = vpack.c.bf16 %v497, %v495
    %v508 = vpack.c.bf16 %v498, %v496
    %v509 = vpack.c.bf16 %v501, %v499
    %v510 = vpack.c.bf16 %v502, %v500
    %v519 = vunpack.c.l.b16 %v503
    %v520 = vunpack.c.l.b16 %v504
    %v521 = vunpack.c.h.b16 %v503
    %v522 = vunpack.c.h.b16 %v504
    %v523 = vunpack.c.l.b16 %v505
    %v524 = vunpack.c.l.b16 %v506
    %v525 = vunpack.c.h.b16 %v505
    %v526 = vunpack.c.h.b16 %v506
    %v527 = vunpack.c.l.b16 %v507
    %v528 = vunpack.c.l.b16 %v508
    %v529 = vunpack.c.h.b16 %v507
    %v530 = vunpack.c.h.b16 %v508
    %v531 = vunpack.c.l.b16 %v509
    %v532 = vunpack.c.l.b16 %v510
    %v533 = vunpack.c.h.b16 %v509
    %v534 = vunpack.c.h.b16 %v510
    %v535 = vpack.c.b16 %v520, %v519
    %v536 = vpack.c.b16 %v522, %v521
    %v537 = vpack.c.b16 %v524, %v523
    %v538 = vpack.c.b16 %v526, %v525
    %v539 = vpack.c.b16 %v528, %v527
    %v540 = vpack.c.b16 %v530, %v529
    %v541 = vpack.c.b16 %v532, %v531
    %v542 = vpack.c.b16 %v534, %v533
    %551 = vst [vmem:[#allocation2] sm:$0xff] %v535
    %552 = vst [vmem:[#allocation2 + $0x8] sm:$0xff] %v536
    %553 = vst [vmem:[#allocation2 + $0x10] sm:$0xff] %v537
    %554 = vst [vmem:[#allocation2 + $0x18] sm:$0xff] %v538
    %555 = vst [vmem:[#allocation2 + $0x20] sm:$0xff] %v539
    %556 = vst [vmem:[#allocation2 + $0x28] sm:$0xff] %v540
    %557 = vst [vmem:[#allocation2 + $0x30] sm:$0xff] %v541
    %558 = vst [vmem:[#allocation2 + $0x38] sm:$0xff] %v542
    // Predicated region
    $region30: #{tpu_custom_call.1} parent=1 // pred_check
      _
    $region31: #{tpu_custom_call.1} parent=1 // pred_check_branch
      %560 = sbr.rel (0) target = $region33
    $region32: #{tpu_custom_call.1} parent=1 // pred_region
      %s562 = ssub.s32 1024, 1024
      %563 = vsyncadd [#allocation3], %s562
      %s564 = sshll.u32 [#allocation2], 4
      %s565 = int_to_ptr.vmem [resolvable:$true] %s564
      %570 = dma.vmem_to_hbm [thread:$0]  %s565, 1024, %s7, [#allocation3], 128, 128, 8
    $region33: #{tpu_custom_call.1} parent=1 // pred_fallthru
      _
    // Predicated region
    $region34: #{tpu_custom_call.1} parent=1 // pred_check
      _
    $region35: #{tpu_custom_call.1} parent=1 // pred_check_branch
      %572 = sbr.rel (0) target = $region37
    $region36: #{tpu_custom_call.1} parent=1 // pred_region
      %573 = dma.done [#allocation3], 1024
    $region37: #{tpu_custom_call.1} parent=1 // pred_fallthru
      _
    %574 = vsyncpa [#allocation3], 1

</llo_original>
